<compile_context>
chip_gen: v7x
topology: tpu7x:2x2x1
jax: 0.10.0
libtpu: 0.0.40
codegen_flags: <defaults>
</compile_context>

<pallas_src>
import functools
import math

import jax
import jax.numpy as jnp
from jax.experimental import pallas as pl
from jax.experimental.pallas import tpu as pltpu


def _round_up(x: int, m: int) -> int:
    return ((x + m - 1) // m) * m


def _fused_mlp_kernel(*refs, n_inputs: int, n_layers: int):
    """Fused concat + (Linear -> ReLU) x n_layers for one batch tile.

    refs layout (inputs, then output):
      z_0 ... z_{J-1}                     per-mixture latent tiles, f32 (tm, D_j)
      w1_0 ... w1_{J-1}                   layer-1 weight split along K, bf16
      b_1                                 layer-1 bias, f32 (1, N1p)
      w_2, b_2, ..., w_L, b_L             remaining layers (bf16 / f32)
      o_ref                               final output tile, f32 (tm, NLp)
    """
    idx = 0
    z_refs = refs[idx:idx + n_inputs]; idx += n_inputs
    w1_refs = refs[idx:idx + n_inputs]; idx += n_inputs
    b1_ref = refs[idx]; idx += 1
    rest = refs[idx:idx + 2 * (n_layers - 1)]; idx += 2 * (n_layers - 1)
    o_ref = refs[idx]

    # ---- layer 1: concat absorbed as a sum of partial dots (shared f32 acc) ----
    acc = None
    for z_ref, w_ref in zip(z_refs, w1_refs):
        part = jnp.dot(z_ref[...].astype(jnp.bfloat16), w_ref[...],
                       preferred_element_type=jnp.float32)
        acc = part if acc is None else acc + part
    h = jnp.maximum(acc + b1_ref[...], 0.0)

    # ---- remaining Linear -> ReLU layers; activations stay on-chip ----
    for l in range(n_layers - 1):
        w_ref = rest[2 * l]
        b_ref = rest[2 * l + 1]
        y = jnp.dot(h.astype(jnp.bfloat16), w_ref[...],
                    preferred_element_type=jnp.float32)
        h = jnp.maximum(y + b_ref[...], 0.0)

    o_ref[...] = h.astype(o_ref.dtype)   # lane-dense (width padded to 128k)


class FCSharedDecoderPallas:
    """JAX/Pallas port of FCSharedDecoder (fused single-kernel MLP)."""

    def __init__(self, layer_dims, J_n_mixtures, key,
                 activation="relu", dropout_prob=0.0, do_fc_batch_norm=False):
        assert activation == "relu"
        assert dropout_prob == 0.0          # dropout(p=0) is identity
        assert not do_fc_batch_norm         # TODO(synk): batch-norm branch not implemented
        self.J_n_mixtures = J_n_mixtures
        self.layer_dims = list(layer_dims)

        # Master f32 parameters (PyTorch nn.Linear default init range).
        self.params_f32 = []
        for i in range(1, len(layer_dims)):
            fan_in, fan_out = layer_dims[i - 1], layer_dims[i]
            key, kw, kb = jax.random.split(key, 3)
            bound = 1.0 / math.sqrt(fan_in)
            w = jax.random.uniform(kw, (fan_in, fan_out), jnp.float32, -bound, bound)
            b = jax.random.uniform(kb, (fan_out,), jnp.float32, -bound, bound)
            self.params_f32.append((w, b))

        # Lane-dense padded kernel parameters: every hidden/output width is
        # zero-padded up to a multiple of 128; weights stored in bf16 for the MXU.
        self.padded_dims = [layer_dims[0]] + [_round_up(d, 128) for d in layer_dims[1:]]
        self.w_pad, self.b_pad = [], []
        for i, (w, b) in enumerate(self.params_f32):
            kin, nout = w.shape
            kin_pad, nout_pad = self.padded_dims[i], self.padded_dims[i + 1]
            wp = jnp.zeros((kin_pad, nout_pad), jnp.float32).at[:kin, :nout].set(w)
            bp = jnp.zeros((1, nout_pad), jnp.float32).at[0, :nout].set(b)
            self.w_pad.append(wp.astype(jnp.bfloat16))
            self.b_pad.append(bp)

        # TODO(synk): for very large layer_dims whose padded weights exceed the
        # per-TC VMEM budget (v7x: 64 MiB), add K/N reduction tiling with an
        # f32 accumulator instead of the full-weight-resident design below.

    def __call__(self, z_sample_q_z_j_x_list):
        z_list = list(z_sample_q_z_j_x_list)
        assert len(z_list) == self.J_n_mixtures
        M = z_list[0].shape[0]
        widths = [int(z.shape[1]) for z in z_list]
        assert sum(widths) == self.layer_dims[0]

        n_layers = len(self.w_pad)
        out_pad = self.padded_dims[-1]

        # Split layer-1 weight along K per mixture (concat absorbed in-kernel).
        w1_splits, off = [], 0
        for w_ in widths:
            w1_splits.append(self.w_pad[0][off:off + w_, :])
            off += w_

        # Batch tiling: single full-extent block for small batches, else 256-row
        # tiles on a "parallel" grid axis (megacore-shardable on v7x).
        tm = M if M <= 256 else 256
        grid = (pl.cdiv(M, tm),)

        in_specs = []
        for w_ in widths:                                     # z tiles
            in_specs.append(pl.BlockSpec((tm, w_), lambda i: (i, 0)))
        for ws in w1_splits:                                  # layer-1 weight splits
            in_specs.append(pl.BlockSpec(ws.shape, lambda i: (0, 0)))
        in_specs.append(pl.BlockSpec(self.b_pad[0].shape, lambda i: (0, 0)))
        for l in range(1, n_layers):                          # remaining layers
            in_specs.append(pl.BlockSpec(self.w_pad[l].shape, lambda i: (0, 0)))
            in_specs.append(pl.BlockSpec(self.b_pad[l].shape, lambda i: (0, 0)))
        out_spec = pl.BlockSpec((tm, out_pad), lambda i: (i, 0))

        # Explicit VMEM budget: 2x (double-buffered) inputs + resident weights
        # + 2x output tile + activation headroom; keep within v7x's 64 MiB.
        weight_bytes = sum(int(w.size) * 2 for w in self.w_pad) \
                     + sum(int(b.size) * 4 for b in self.b_pad)
        z_bytes = sum(tm * w_ * 4 for w_ in widths)
        act_bytes = tm * max(self.padded_dims[1:]) * 4
        need = 2 * (weight_bytes + z_bytes) + 4 * act_bytes + 2 * tm * out_pad * 4
        vmem_limit = int(min(max(2 * need, 32 << 20), 64 << 20))

        args = z_list + w1_splits + [self.b_pad[0]]
        for l in range(1, n_layers):
            args += [self.w_pad[l], self.b_pad[l]]

        out = pl.pallas_call(
            functools.partial(_fused_mlp_kernel,
                              n_inputs=len(z_list), n_layers=n_layers),
            out_shape=jax.ShapeDtypeStruct((M, out_pad), jnp.float32),
            grid_spec=pl.GridSpec(grid=grid, in_specs=in_specs, out_specs=out_spec),
            compiler_params=pltpu.CompilerParams(
                dimension_semantics=("parallel",),
                vmem_limit_bytes=vmem_limit),
        )(*args)

        # Drop the lane-padding columns of the final layer.
        return out[:, :self.layer_dims[-1]]


def _reference(decoder, z_list):
    """Pure-JAX reference with the same bf16-input / f32-accumulate math."""
    h = jnp.concatenate(z_list, axis=1)
    for (w, b) in decoder.params_f32:
        y = jnp.dot(h.astype(jnp.bfloat16), w.astype(jnp.bfloat16),
                    preferred_element_type=jnp.float32) + b
        h = jnp.maximum(y, 0.0)
    return h


if __name__ == "__main__":
    key = jax.random.PRNGKey(0)

    # Small, module-consistent shapes.
    J_n_mixtures = 2
    latent_dim = 16                                     # per-mixture latent dim
    layer_dims = [J_n_mixtures * latent_dim, 64, 32]    # MLP: 32 -> 64 -> 32
    batch = 8

    key, k_model, k1, k2 = jax.random.split(key, 4)
    decoder = FCSharedDecoderPallas(layer_dims, J_n_mixtures, k_model)

    z_list = [
        jax.random.normal(k1, (batch, latent_dim), jnp.float32),
        jax.random.normal(k2, (batch, latent_dim), jnp.float32),
    ]

    out = jax.block_until_ready(decoder(z_list))
    ref = _reference(decoder, z_list)

    assert out.shape == (batch, layer_dims[-1])
    assert jnp.allclose(out, ref, atol=1e-3, rtol=1e-3), "mismatch vs reference"

    print("KERNEL_OK")
</pallas_src>

<mosaic_0001>
module attributes {stable_mosaic.version = 11 : i64} {
  func.func @_fused_mlp_kernel(%arg0: i32, %arg1: memref<8x16xf32, #tpu.memory_space<vmem>>, %arg2: memref<8x16xf32, #tpu.memory_space<vmem>>, %arg3: memref<16x128xbf16, #tpu.memory_space<vmem>>, %arg4: memref<16x128xbf16, #tpu.memory_space<vmem>>, %arg5: memref<1x128xf32, #tpu.memory_space<vmem>>, %arg6: memref<128x128xbf16, #tpu.memory_space<vmem>>, %arg7: memref<1x128xf32, #tpu.memory_space<vmem>>, %arg8: memref<8x128xf32, #tpu.memory_space<vmem>>) attributes {dimension_semantics = [#tpu.dimension_semantics<parallel>], iteration_bounds = array<i64: 1>, scalar_prefetch = 0 : i64, scratch_operands = 0 : i64, tpu.core_type = #tpu.core_type<tc>, window_params = [{transform_indices = @transform_0, window_bounds = array<i64: 8, 16>}, {transform_indices = @transform_1, window_bounds = array<i64: 8, 16>}, {pipeline_mode = #tpu.pipeline_mode<synchronous>, transform_indices = @transform_2, window_bounds = array<i64: 16, 128>}, {pipeline_mode = #tpu.pipeline_mode<synchronous>, transform_indices = @transform_3, window_bounds = array<i64: 16, 128>}, {pipeline_mode = #tpu.pipeline_mode<synchronous>, transform_indices = @transform_4, window_bounds = array<i64: 1, 128>}, {pipeline_mode = #tpu.pipeline_mode<synchronous>, transform_indices = @transform_5, window_bounds = array<i64: 128, 128>}, {pipeline_mode = #tpu.pipeline_mode<synchronous>, transform_indices = @transform_6, window_bounds = array<i64: 1, 128>}, {transform_indices = @transform_7, window_bounds = array<i64: 8, 128>}]} {
    %c0 = arith.constant 0 : index
    %c0_0 = arith.constant 0 : index
    %0 = vector.load %arg1[%c0, %c0_0] : memref<8x16xf32, #tpu.memory_space<vmem>>, vector<8x16xf32>
    %1 = arith.truncf %0 : vector<8x16xf32> to vector<8x16xbf16>
    %c0_1 = arith.constant 0 : index
    %c0_2 = arith.constant 0 : index
    %2 = vector.load %arg3[%c0_1, %c0_2] : memref<16x128xbf16, #tpu.memory_space<vmem>>, vector<16x128xbf16>
    %cst = arith.constant dense<0.000000e+00> : vector<8x128xf32>
    %3 = tpu.matmul %1, %2, %cst {dimension_numbers = #tpu.dot_dimension_numbers<[1], [0], [0], [1], [0, 0, 1, 1], [], []>} : vector<8x16xbf16>, vector<16x128xbf16>, vector<8x128xf32> -> vector<8x128xf32>
    %c0_3 = arith.constant 0 : index
    %c0_4 = arith.constant 0 : index
    %4 = vector.load %arg2[%c0_3, %c0_4] : memref<8x16xf32, #tpu.memory_space<vmem>>, vector<8x16xf32>
    %5 = arith.truncf %4 : vector<8x16xf32> to vector<8x16xbf16>
    %c0_5 = arith.constant 0 : index
    %c0_6 = arith.constant 0 : index
    %6 = vector.load %arg4[%c0_5, %c0_6] : memref<16x128xbf16, #tpu.memory_space<vmem>>, vector<16x128xbf16>
    %cst_7 = arith.constant dense<0.000000e+00> : vector<8x128xf32>
    %7 = tpu.matmul %5, %6, %cst_7 {dimension_numbers = #tpu.dot_dimension_numbers<[1], [0], [0], [1], [0, 0, 1, 1], [], []>} : vector<8x16xbf16>, vector<16x128xbf16>, vector<8x128xf32> -> vector<8x128xf32>
    %8 = arith.addf %3, %7 : vector<8x128xf32>
    %c0_8 = arith.constant 0 : index
    %c0_9 = arith.constant 0 : index
    %9 = vector.load %arg5[%c0_8, %c0_9] : memref<1x128xf32, #tpu.memory_space<vmem>>, vector<1x128xf32>
    %10 = vector.broadcast %9 : vector<1x128xf32> to vector<8x128xf32>
    %11 = arith.addf %8, %10 : vector<8x128xf32>
    %cst_10 = arith.constant 0.000000e+00 : f32
    %12 = vector.broadcast %cst_10 : f32 to vector<8x128xf32>
    %13 = arith.maximumf %11, %12 : vector<8x128xf32>
    %14 = arith.truncf %13 : vector<8x128xf32> to vector<8x128xbf16>
    %c0_11 = arith.constant 0 : index
    %c0_12 = arith.constant 0 : index
    %15 = vector.load %arg6[%c0_11, %c0_12] : memref<128x128xbf16, #tpu.memory_space<vmem>>, vector<128x128xbf16>
    %cst_13 = arith.constant dense<0.000000e+00> : vector<8x128xf32>
    %16 = tpu.matmul %14, %15, %cst_13 {dimension_numbers = #tpu.dot_dimension_numbers<[1], [0], [0], [1], [0, 0, 1, 1], [], []>} : vector<8x128xbf16>, vector<128x128xbf16>, vector<8x128xf32> -> vector<8x128xf32>
    %c0_14 = arith.constant 0 : index
    %c0_15 = arith.constant 0 : index
    %17 = vector.load %arg7[%c0_14, %c0_15] : memref<1x128xf32, #tpu.memory_space<vmem>>, vector<1x128xf32>
    %18 = vector.broadcast %17 : vector<1x128xf32> to vector<8x128xf32>
    %19 = arith.addf %16, %18 : vector<8x128xf32>
    %cst_16 = arith.constant 0.000000e+00 : f32
    %20 = vector.broadcast %cst_16 : f32 to vector<8x128xf32>
    %21 = arith.maximumf %19, %20 : vector<8x128xf32>
    %c0_17 = arith.constant 0 : index
    %c0_18 = arith.constant 0 : index
    %22 = vector.load %arg8[%c0_17, %c0_18] : memref<8x128xf32, #tpu.memory_space<vmem>>, vector<8x128xf32>
    tpu.vector_store %arg8[%c0_17, %c0_18], %21 {strides = array<i32>} : memref<8x128xf32, #tpu.memory_space<vmem>>, vector<8x128xf32>,
    return
  }
  func.func @transform_0(%arg0: i32) -> (i32, i32) {
    %c0_i32 = arith.constant 0 : i32
    %c0_i32_0 = arith.constant 0 : i32
    return %arg0, %c0_i32 : i32, i32
  }
  func.func @transform_1(%arg0: i32) -> (i32, i32) {
    %c0_i32 = arith.constant 0 : i32
    %c0_i32_0 = arith.constant 0 : i32
    return %arg0, %c0_i32 : i32, i32
  }
  func.func @transform_2(%arg0: i32) -> (i32, i32) {
    %c0_i32 = arith.constant 0 : i32
    %c0_i32_0 = arith.constant 0 : i32
    %c0_i32_1 = arith.constant 0 : i32
    return %c0_i32, %c0_i32_0 : i32, i32
  }
  func.func @transform_3(%arg0: i32) -> (i32, i32) {
    %c0_i32 = arith.constant 0 : i32
    %c0_i32_0 = arith.constant 0 : i32
    %c0_i32_1 = arith.constant 0 : i32
    return %c0_i32, %c0_i32_0 : i32, i32
  }
  func.func @transform_4(%arg0: i32) -> (i32, i32) {
    %c0_i32 = arith.constant 0 : i32
    %c0_i32_0 = arith.constant 0 : i32
    %c0_i32_1 = arith.constant 0 : i32
    return %c0_i32, %c0_i32_0 : i32, i32
  }
  func.func @transform_5(%arg0: i32) -> (i32, i32) {
    %c0_i32 = arith.constant 0 : i32
    %c0_i32_0 = arith.constant 0 : i32
    %c0_i32_1 = arith.constant 0 : i32
    return %c0_i32, %c0_i32_0 : i32, i32
  }
  func.func @transform_6(%arg0: i32) -> (i32, i32) {
    %c0_i32 = arith.constant 0 : i32
    %c0_i32_0 = arith.constant 0 : i32
    %c0_i32_1 = arith.constant 0 : i32
    return %c0_i32, %c0_i32_0 : i32, i32
  }
  func.func @transform_7(%arg0: i32) -> (i32, i32) {
    %c0_i32 = arith.constant 0 : i32
    %c0_i32_0 = arith.constant 0 : i32
    return %arg0, %c0_i32 : i32, i32
  }
}

</mosaic_0001>

<llo_original>
// kernel: tpu_custom_call.1
$region0: #{tpu_custom_call.1}
  #allocation0 [shape = 'u32[]', space=smem, size = 0x4, offset = 0x4, fixed_abs, tag = 'smem constant byte address 0x4 - core index']
  #allocation1 [shape = 'u32[144,128]{1,0:T(1,128)}', space=vmem, size = 0x12000, scoped, tag = 'internal scratch']
  %s0 = inlined_call_operand.hbm [shape: f32[8,16], index: 0, kind: input, shape index: {}]
  %s1 = inlined_call_operand.hbm [shape: f32[8,16], index: 1, kind: input, shape index: {}]
  %s2 = inlined_call_operand.hbm [shape: bf16[16,128], index: 2, kind: input, shape index: {}]
  %s3 = inlined_call_operand.vmem [shape: bf16[16,128], index: 3, kind: input, shape index: {}]
  %s4 = inlined_call_operand.vmem [shape: f32[1,128], index: 4, kind: input, shape index: {}]
  %s5 = inlined_call_operand.hbm [shape: bf16[128,128], index: 5, kind: input, shape index: {}]
  %s6 = inlined_call_operand.vmem [shape: f32[1,128], index: 6, kind: input, shape index: {}]
  %s7 = inlined_call_operand.hbm [shape: f32[8,128], index: 7, kind: output, shape index: {}]
  %s8 = sld [smem:[#allocation0]]
  $region54: #{tpu_custom_call.1} parent=0
    _
  %s10 = ssub.s32 1, %s8
  %s11 = scalar_select 0, %s10, %s8
  $region1: #{tpu_custom_call.1} parent=0
    #allocation2 [shape = 'u8[4096]{0}', space=vmem, size = 0x1000, scoped, tag = 'input window, operand 0, single buffered']
    #allocation3 [shape = 's32[1]{0}', space=sflag, size = 0x4, scoped, tag = 'scoped memory for tpu_custom_call.1']
    #allocation4 [shape = 's32[1]{0}', space=sflag, size = 0x4, scoped, tag = 'scoped memory for tpu_custom_call.1']
    #allocation5 [shape = 'u8[4096]{0}', space=vmem, size = 0x1000, scoped, tag = 'input window, operand 1, single buffered']
    #allocation6 [shape = 's32[1]{0}', space=sflag, size = 0x4, scoped, tag = 'scoped memory for tpu_custom_call.1']
    #allocation7 [shape = 'u8[4096]{0}', space=vmem, size = 0x1000, scoped, tag = 'input window, operand 2, single buffered']
    #allocation8 [shape = 'u8[32768]{0}', space=vmem, size = 0x8000, scoped, tag = 'input window, operand 5, single buffered']
    #allocation9 [shape = 's32[1]{0}', space=sflag, size = 0x4, scoped, tag = 'scoped memory for tpu_custom_call.1']
    #allocation10 [shape = 'u8[4096]{0}', space=vmem, size = 0x1000, scoped, tag = 'output window, operand 0, single buffered']
    %12 = vsyncpa [#allocation3], 0
    %13 = vsyncpa [#allocation6], 0
    %14 = vsyncpa [#allocation9], 0
    %15 = vsyncpa [#allocation4], 0
    // Predicated region
    $region2: #{tpu_custom_call.1} parent=1 // pred_check
      _
    $region3: #{tpu_custom_call.1} parent=1 // pred_check_branch
      %17 = sbr.rel (0) target = $region5
    $region4: #{tpu_custom_call.1} parent=1 // pred_region
      %s19 = ssub.s32 128, 128
      %20 = vsyncadd [#allocation3], %s19
      %s22 = sshll.u32 [#allocation2], 4
      %s23 = int_to_ptr.vmem [resolvable:$true] %s22
      %25 = dma.hbm_to_vmem [thread:$0]  %s0, 128, %s23, [#allocation3]
    $region5: #{tpu_custom_call.1} parent=1 // pred_fallthru
      _
    // Predicated region
    $region6: #{tpu_custom_call.1} parent=1 // pred_check
      _
    $region7: #{tpu_custom_call.1} parent=1 // pred_check_branch
      %27 = sbr.rel (0) target = $region9
    $region8: #{tpu_custom_call.1} parent=1 // pred_region
      %s29 = ssub.s32 128, 128
      %30 = vsyncadd [#allocation6], %s29
      %s32 = sshll.u32 [#allocation5], 4
      %s33 = int_to_ptr.vmem [resolvable:$true] %s32
      %35 = dma.hbm_to_vmem [thread:$0]  %s1, 128, %s33, [#allocation6]
    $region9: #{tpu_custom_call.1} parent=1 // pred_fallthru
      _
    // Predicated region
    $region10: #{tpu_custom_call.1} parent=1 // pred_check
      _
    $region11: #{tpu_custom_call.1} parent=1 // pred_check_branch
      %37 = sbr.rel (0) target = $region13
    $region12: #{tpu_custom_call.1} parent=1 // pred_region
      %s39 = ssub.s32 128, 128
      %40 = vsyncadd [#allocation6], %s39
      %s41 = sshll.u32 [#allocation7], 4
      %s42 = int_to_ptr.vmem [resolvable:$true] %s41
      %47 = dma.hbm_to_vmem [thread:$0]  %s2, 128, %s42, [#allocation6], 64, 64, 4
    $region13: #{tpu_custom_call.1} parent=1 // pred_fallthru
      _
    // Predicated region
    $region14: #{tpu_custom_call.1} parent=1 // pred_check
      _
    $region15: #{tpu_custom_call.1} parent=1 // pred_check_branch
      %49 = sbr.rel (0) target = $region17
    $region16: #{tpu_custom_call.1} parent=1 // pred_region
      _
    $region17: #{tpu_custom_call.1} parent=1 // pred_fallthru
      _
    // Predicated region
    $region18: #{tpu_custom_call.1} parent=1 // pred_check
      _
    $region19: #{tpu_custom_call.1} parent=1 // pred_check_branch
      %51 = sbr.rel (0) target = $region21
    $region20: #{tpu_custom_call.1} parent=1 // pred_region
      _
    $region21: #{tpu_custom_call.1} parent=1 // pred_fallthru
      _
    // Predicated region
    $region22: #{tpu_custom_call.1} parent=1 // pred_check
      _
    $region23: #{tpu_custom_call.1} parent=1 // pred_check_branch
      %53 = sbr.rel (0) target = $region25
    $region24: #{tpu_custom_call.1} parent=1 // pred_region
      %s55 = ssub.s32 1024, 1024
      %56 = vsyncadd [#allocation9], %s55
      %s57 = sshll.u32 [#allocation8], 4
      %s58 = int_to_ptr.vmem [resolvable:$true] %s57
      %63 = dma.hbm_to_vmem [thread:$0]  %s5, 1024, %s58, [#allocation9], 64, 64, 4
    $region25: #{tpu_custom_call.1} parent=1 // pred_fallthru
      _
    // Predicated region
    $region26: #{tpu_custom_call.1} parent=1 // pred_check
      _
    $region27: #{tpu_custom_call.1} parent=1 // pred_check_branch
      %65 = sbr.rel (0) target = $region29
    $region28: #{tpu_custom_call.1} parent=1 // pred_region
      _
    $region29: #{tpu_custom_call.1} parent=1 // pred_fallthru
      _
    // Predicated region
    $region30: #{tpu_custom_call.1} parent=1 // pred_check
      _
    $region31: #{tpu_custom_call.1} parent=1 // pred_check_branch
      %67 = sbr.rel (0) target = $region33
    $region32: #{tpu_custom_call.1} parent=1 // pred_region
      %68 = dma.done [#allocation3], 128
    $region33: #{tpu_custom_call.1} parent=1 // pred_fallthru
      _
    // Predicated region
    $region34: #{tpu_custom_call.1} parent=1 // pred_check
      _
    $region35: #{tpu_custom_call.1} parent=1 // pred_check_branch
      %70 = sbr.rel (0) target = $region37
    $region36: #{tpu_custom_call.1} parent=1 // pred_region
      %71 = dma.done [#allocation6], 128
    $region37: #{tpu_custom_call.1} parent=1 // pred_fallthru
      _
    // Predicated region
    $region38: #{tpu_custom_call.1} parent=1 // pred_check
      _
    $region39: #{tpu_custom_call.1} parent=1 // pred_check_branch
      %73 = sbr.rel (0) target = $region41
    $region40: #{tpu_custom_call.1} parent=1 // pred_region
      %74 = dma.done [#allocation6], 128
    $region41: #{tpu_custom_call.1} parent=1 // pred_fallthru
      _
    // Predicated region
    $region42: #{tpu_custom_call.1} parent=1 // pred_check
      _
    $region43: #{tpu_custom_call.1} parent=1 // pred_check_branch
      %76 = sbr.rel (0) target = $region45
    $region44: #{tpu_custom_call.1} parent=1 // pred_region
      %77 = dma.done [#allocation9], 1024
    $region45: #{tpu_custom_call.1} parent=1 // pred_fallthru
      _
    %v79 = vld [vmem:[#allocation2] sm:$0xff]
    %v80 = vpack.c.bf16 %v79, %v79
    %v81 = vld [vmem:[#allocation7] sm:$0xf]
    %v82 = vld [vmem:[#allocation7 + $0x4] sm:$0xf]
    %v83 = vld [vmem:[#allocation5] sm:$0xff]
    %v84 = vpack.c.bf16 %v83, %v83
    %v85 = vld [vmem:[%s3] sm:$0xf]
    %v86 = vld [vmem:[%s3 + $0x4] sm:$0xf]
    %v89 = vunpack.c.l.b16 %v85
    %v90 = vunpack.c.l.b16 %v86
    %v91 = vpack.c.b16 %v90, %v89
    %vm93 = vcmask 130048
    %v95 = vsel %vm93, %v84, 0
    %97 = vmatprep.subr.bf16.mxu0 0
    %98 = vmatpush1.bf16.msra.mxu0 %v91
    %99 = vmatprep.subr.bf16.mxu0 0
    %100 = vmatpush1.bf16.msra.mxu0 0
    %101 = vmatprep.subr.bf16.mxu0 0
    %102 = vmatpush1.bf16.msra.mxu0 0
    %103 = vmatprep.subr.bf16.mxu0 0
    %104 = vmatpush1.bf16.msra.mxu0 0
    %105 = vmatprep.subr.bf16.mxu0 0
    %106 = vmatpush1.bf16.msra.mxu0 0
    %107 = vmatprep.subr.bf16.mxu0 0
    %108 = vmatpush1.bf16.msra.mxu0 0
    %109 = vmatprep.subr.bf16.mxu0 0
    %110 = vmatpush1.bf16.msra.mxu0 0
    %111 = vmatprep.subr.bf16.mxu0 0
    %112 = vmatpush1.bf16.msra.mxu0 0
    %113 = vmatprep.subr.bf16.mxu0 0
    %114 = vmatpush1.bf16.msra.mxu0 0
    %115 = vmatprep.subr.bf16.mxu0 0
    %116 = vmatpush1.bf16.msra.mxu0 0
    %117 = vmatprep.subr.bf16.mxu0 0
    %118 = vmatpush1.bf16.msra.mxu0 0
    %119 = vmatprep.subr.bf16.mxu0 0
    %120 = vmatpush1.bf16.msra.mxu0 0
    %121 = vmatprep.subr.bf16.mxu0 0
    %122 = vmatpush1.bf16.msra.mxu0 0
    %123 = vmatprep.subr.bf16.mxu0 0
    %124 = vmatpush1.bf16.msra.mxu0 0
    %125 = vmatprep.subr.bf16.mxu0 0
    %126 = vmatpush1.bf16.msra.mxu0 0
    %127 = vmatprep.subr.bf16.mxu0 0
    %128 = vmatpush1.bf16.msra.mxu0 0
    %129 = vmatprep.mubr.bf16.mxu0 0
    %130 = vmatmul.mubr.bf16.gmra.mrb[0].mxu0 %v95
    %v131 = vpop.f32.mrb[0].mxu0
    %v132 = vadd.f32 0.0, %v131
    %v133 = vpop.f32.mrb[0].mxu0
    %v134 = vpop.f32.mrb[0].mxu0
    %v135 = vpop.f32.mrb[0].mxu0
    %136 = vdwg.mxu0
    %v139 = vunpack.c.l.b16 %v81
    %v140 = vunpack.c.l.b16 %v82
    %v141 = vpack.c.b16 %v140, %v139
    %v144 = vsel %vm93, %v80, 0
    %146 = vmatprep.subr.bf16.mxu0 0
    %147 = vmatpush1.bf16.msra.mxu0 %v141
    %148 = vmatprep.subr.bf16.mxu0 0
    %149 = vmatpush1.bf16.msra.mxu0 0
    %150 = vmatprep.subr.bf16.mxu0 0
    %151 = vmatpush1.bf16.msra.mxu0 0
    %152 = vmatprep.subr.bf16.mxu0 0
    %153 = vmatpush1.bf16.msra.mxu0 0
    %154 = vmatprep.subr.bf16.mxu0 0
    %155 = vmatpush1.bf16.msra.mxu0 0
    %156 = vmatprep.subr.bf16.mxu0 0
    %157 = vmatpush1.bf16.msra.mxu0 0
    %158 = vmatprep.subr.bf16.mxu0 0
    %159 = vmatpush1.bf16.msra.mxu0 0
    %160 = vmatprep.subr.bf16.mxu0 0
    %161 = vmatpush1.bf16.msra.mxu0 0
    %162 = vmatprep.subr.bf16.mxu0 0
    %163 = vmatpush1.bf16.msra.mxu0 0
    %164 = vmatprep.subr.bf16.mxu0 0
    %165 = vmatpush1.bf16.msra.mxu0 0
    %166 = vmatprep.subr.bf16.mxu0 0
    %167 = vmatpush1.bf16.msra.mxu0 0
    %168 = vmatprep.subr.bf16.mxu0 0
    %169 = vmatpush1.bf16.msra.mxu0 0
    %170 = vmatprep.subr.bf16.mxu0 0
    %171 = vmatpush1.bf16.msra.mxu0 0
    %172 = vmatprep.subr.bf16.mxu0 0
    %173 = vmatpush1.bf16.msra.mxu0 0
    %174 = vmatprep.subr.bf16.mxu0 0
    %175 = vmatpush1.bf16.msra.mxu0 0
    %176 = vmatprep.subr.bf16.mxu0 0
    %177 = vmatpush1.bf16.msra.mxu0 0
    %178 = vmatprep.mubr.bf16.mxu0 0
    %179 = vmatmul.mubr.bf16.gmra.mrb[0].mxu0 %v144
    %v180 = vpop.f32.mrb[0].mxu0
    %v181 = vadd.f32 %v132, %v180
    %v182 = vpop.f32.mrb[0].mxu0
    %v183 = vpop.f32.mrb[0].mxu0
    %v184 = vpop.f32.mrb[0].mxu0
    %185 = vdwg.mxu0
    %v186 = vld [vmem:[%s4] sm:$0x1]
    %v188 = vlaneseq
    %v189 = vshrl.u32 %v188, 7
    %v190 = vsub.s32 0, %v189
    %v191 = vrot.slane %v186, %v190
    %v193 = vadd.f32 %v181, %v191
    %v194 = vmax.f32 %v193, 0.0
    %v195 = vpack.c.bf16 %v194, %v194
    %v196 = vld [vmem:[#allocation8] sm:$0xf]
    %v197 = vld [vmem:[#allocation8 + $0x4] sm:$0xf]
    %v198 = vld [vmem:[#allocation8 + $0x8] sm:$0xf]
    %v199 = vld [vmem:[#allocation8 + $0xc] sm:$0xf]
    %v200 = vld [vmem:[#allocation8 + $0x10] sm:$0xf]
    %v201 = vld [vmem:[#allocation8 + $0x14] sm:$0xf]
    %v202 = vld [vmem:[#allocation8 + $0x18] sm:$0xf]
    %v203 = vld [vmem:[#allocation8 + $0x1c] sm:$0xf]
    %v204 = vld [vmem:[#allocation8 + $0x20] sm:$0xf]
    %v205 = vld [vmem:[#allocation8 + $0x24] sm:$0xf]
    %v206 = vld [vmem:[#allocation8 + $0x28] sm:$0xf]
    %v207 = vld [vmem:[#allocation8 + $0x2c] sm:$0xf]
    %v208 = vld [vmem:[#allocation8 + $0x30] sm:$0xf]
    %v209 = vld [vmem:[#allocation8 + $0x34] sm:$0xf]
    %v210 = vld [vmem:[#allocation8 + $0x38] sm:$0xf]
    %v211 = vld [vmem:[#allocation8 + $0x3c] sm:$0xf]
    %v212 = vld [vmem:[%s6] sm:$0x1]
    %v214 = vlaneseq
    %v215 = vshrl.u32 %v214, 7
    %v216 = vsub.s32 0, %v215
    %v217 = vrot.slane %v212, %v216
    %v235 = vunpack.c.l.b16 %v196
    %v236 = vunpack.c.l.b16 %v197
    %v237 = vunpack.c.l.b16 %v198
    %v238 = vunpack.c.l.b16 %v199
    %v239 = vunpack.c.l.b16 %v200
    %v240 = vunpack.c.l.b16 %v201
    %v241 = vunpack.c.l.b16 %v202
    %v242 = vunpack.c.l.b16 %v203
    %v243 = vunpack.c.l.b16 %v204
    %v244 = vunpack.c.l.b16 %v205
    %v245 = vunpack.c.l.b16 %v206
    %v246 = vunpack.c.l.b16 %v207
    %v247 = vunpack.c.l.b16 %v208
    %v248 = vunpack.c.l.b16 %v209
    %v249 = vunpack.c.l.b16 %v210
    %v250 = vunpack.c.l.b16 %v211
    %v251 = vpack.c.b16 %v236, %v235
    %v252 = vpack.c.b16 %v238, %v237
    %v253 = vpack.c.b16 %v240, %v239
    %v254 = vpack.c.b16 %v242, %v241
    %v255 = vpack.c.b16 %v244, %v243
    %v256 = vpack.c.b16 %v246, %v245
    %v257 = vpack.c.b16 %v248, %v247
    %v258 = vpack.c.b16 %v250, %v249
    %267 = vmatprep.subr.bf16.mxu0 0
    %268 = vmatpush1.bf16.msra.mxu0 %v251
    %269 = vmatprep.subr.bf16.mxu0 0
    %270 = vmatpush1.bf16.msra.mxu0 %v252
    %271 = vmatprep.subr.bf16.mxu0 0
    %272 = vmatpush1.bf16.msra.mxu0 %v253
    %273 = vmatprep.subr.bf16.mxu0 0
    %274 = vmatpush1.bf16.msra.mxu0 %v254
    %275 = vmatprep.subr.bf16.mxu0 0
    %276 = vmatpush1.bf16.msra.mxu0 %v255
    %277 = vmatprep.subr.bf16.mxu0 0
    %278 = vmatpush1.bf16.msra.mxu0 %v256
    %279 = vmatprep.subr.bf16.mxu0 0
    %280 = vmatpush1.bf16.msra.mxu0 %v257
    %281 = vmatprep.subr.bf16.mxu0 0
    %282 = vmatpush1.bf16.msra.mxu0 %v258
    %283 = vmatprep.subr.bf16.mxu0 0
    %284 = vmatpush1.bf16.msra.mxu0 0
    %285 = vmatprep.subr.bf16.mxu0 0
    %286 = vmatpush1.bf16.msra.mxu0 0
    %287 = vmatprep.subr.bf16.mxu0 0
    %288 = vmatpush1.bf16.msra.mxu0 0
    %289 = vmatprep.subr.bf16.mxu0 0
    %290 = vmatpush1.bf16.msra.mxu0 0
    %291 = vmatprep.subr.bf16.mxu0 0
    %292 = vmatpush1.bf16.msra.mxu0 0
    %293 = vmatprep.subr.bf16.mxu0 0
    %294 = vmatpush1.bf16.msra.mxu0 0
    %295 = vmatprep.subr.bf16.mxu0 0
    %296 = vmatpush1.bf16.msra.mxu0 0
    %297 = vmatprep.subr.bf16.mxu0 0
    %298 = vmatpush1.bf16.msra.mxu0 0
    %299 = vmatprep.mubr.bf16.mxu0 0
    %300 = vmatmul.mubr.bf16.gmra.mrb[0].mxu0 %v195
    %v301 = vpop.f32.mrb[0].mxu0
    %v302 = vadd.f32 %v217, %v301
    %v303 = vpop.f32.mrb[0].mxu0
    %v304 = vpop.f32.mrb[0].mxu0
    %v305 = vpop.f32.mrb[0].mxu0
    %306 = vdwg.mxu0
    %v307 = vmax.f32 %v302, 0.0
    %308 = vst [vmem:[#allocation10] sm:$0xff] %v307
    // Predicated region
    $region46: #{tpu_custom_call.1} parent=1 // pred_check
      _
    $region47: #{tpu_custom_call.1} parent=1 // pred_check_branch
      %310 = sbr.rel (0) target = $region49
    $region48: #{tpu_custom_call.1} parent=1 // pred_region
      %s312 = ssub.s32 128, 128
      %313 = vsyncadd [#allocation4], %s312
      %s315 = sshll.u32 [#allocation10], 4
      %s316 = int_to_ptr.vmem [resolvable:$true] %s315
      %318 = dma.vmem_to_hbm [thread:$0]  %s316, 128, %s7, [#allocation4]
    $region49: #{tpu_custom_call.1} parent=1 // pred_fallthru
      _
    // Predicated region
    $region50: #{tpu_custom_call.1} parent=1 // pred_check
      _
    $region51: #{tpu_custom_call.1} parent=1 // pred_check_branch
      %320 = sbr.rel (0) target = $region53
    $region52: #{tpu_custom_call.1} parent=1 // pred_region
      %321 = dma.done [#allocation4], 128
    $region53: #{tpu_custom_call.1} parent=1 // pred_fallthru
      _
    %322 = vsyncpa [#allocation3], 1
    %323 = vsyncpa [#allocation6], 1
    %324 = vsyncpa [#allocation9], 1
    %325 = vsyncpa [#allocation4], 1

</llo_original>
